<compile_context>
chip_gen: v7x
topology: tpu7x:2x2x1
jax: 0.10.0
libtpu: 0.0.40
codegen_flags: <defaults>
</compile_context>

<pallas_src>
import functools

import jax
import jax.numpy as jnp
from jax import lax
from jax.experimental import pallas as pl
from jax.experimental.pallas import tpu as pltpu


# ----------------------------- in-kernel helpers ------------------------------------------- #
def _shift_lanes(x, s):
    """Zero-filled lane shift: result[:, j] = x[:, j - s] if 0 <= j - s < M else 0."""
    c, m = x.shape
    if s == 0:
        return x
    if abs(s) >= m:
        return jnp.zeros_like(x)
    z = jnp.zeros((c, abs(s)), dtype=x.dtype)
    if s > 0:
        return jnp.concatenate([z, x[:, : m - s]], axis=1)
    return jnp.concatenate([x[:, -s:], z], axis=1)


# ----------------------------- Kernel: 3x3 conv, padding=1, stride=1 ----------------------- #
def _conv3x3_kernel(x_ref, w_ref, b_ref, col_ref, o_ref, *, W):
    # x_ref:   (1, Cin, M)        flat NCHW image (M = H*W), VMEM resident across Cout axis
    # w_ref:   (Cout_blk, 9*Cin)  im2col weights, tap-major reduction axis
    # b_ref:   (Cout_blk, 1)      bias (f32)
    # col_ref: (1, M)             int32 column-in-row index (j % W), precomputed in wrapper
    # o_ref:   (1, Cout_blk, M)   channel-major, lane-dense output
    x = x_ref[0]                                    # (Cin, M)
    col = col_ref[...]                              # (1, M)
    left_ok = col != 0                              # kw == 0 taps: column w-1 is outside the image
    right_ok = col != (W - 1)                       # kw == 2 taps: column w+1 is outside the image

    pieces = []
    for kh in range(3):
        for kw in range(3):
            # Output (h, w) needs input (h + kh - 1, w + kw - 1); on the flat spatial axis
            # that is a shift by (1 - kh) * W + (1 - kw). Zero fill covers the top/bottom
            # image rows; the column masks zero the row-wrap positions.
            p = _shift_lanes(x, (1 - kh) * W + (1 - kw))
            if kw == 0:
                p = jnp.where(left_ok, p, jnp.zeros_like(p))
            elif kw == 2:
                p = jnp.where(right_ok, p, jnp.zeros_like(p))
            pieces.append(p)
    patch = jnp.concatenate(pieces, axis=0)         # (9*Cin, M), tap-major reduction axis

    # Single fused MXU contraction; accumulator is born channel-major (Cout_blk, M).
    acc = jnp.dot(w_ref[...], patch, preferred_element_type=jnp.float32)
    acc = acc + b_ref[...]                          # (Cout_blk, 1) broadcast
    o_ref[...] = acc[None].astype(o_ref.dtype)      # one lane-dense store per step


# ----------------------------- Wrapper ------------------------------------------------------ #
def _choose_cout_block(cout, n_batch):
    # Split Cout only when it is large (VMEM) or when the batch alone cannot feed two
    # TensorCores (v7x). The block must be a multiple of 8 or the full extent.
    if cout > 256:
        for cb in (256, 128, 64, 32, 16, 8):
            if cout % cb == 0:
                return cb
    if n_batch < 2 and cout >= 16 and cout % 16 == 0:
        return cout // 2
    return cout


def conv2d_3x3_p1(x, weight, bias):
    # x: (N, Cin, H, W) NCHW; weight: (Cout, Cin, 3, 3) [torch Conv2d layout]; bias: (Cout,)
    N, Cin, H, W = x.shape
    Cout, _, K, _ = weight.shape
    assert K == 3
    M = H * W

    x_flat = x.reshape(N, Cin, M)                                    # free metadata reshape
    # Fold taps: w2[co, (kh*3 + kw)*Cin + ci] = weight[co, ci, kh, kw]  (cross-correlation).
    w2 = jnp.transpose(weight, (0, 2, 3, 1)).reshape(Cout, K * K * Cin).astype(x.dtype)
    b2 = bias.reshape(Cout, 1).astype(jnp.float32)
    col_ids = jnp.tile(jnp.arange(W, dtype=jnp.int32), H).reshape(1, M)

    cout_blk = _choose_cout_block(Cout, N)
    n_cb = Cout // cout_blk

    # Rough VMEM budget (double-buffered blocks + in-kernel im2col temporaries); only raise
    # the scoped limit above the 32 MiB default when actually needed.
    elt = x.dtype.itemsize
    est = (2 * Cin * M * elt + 2 * cout_blk * M * elt
           + 14 * Cin * M * max(elt, 4)
           + cout_blk * (9 * Cin * elt + 4) + 4 * M + (1 << 20))
    vmem_limit = None if est <= (30 << 20) else int(min(est, 112 << 20))

    out = pl.pallas_call(
        functools.partial(_conv3x3_kernel, W=W),
        out_shape=jax.ShapeDtypeStruct((N, Cout, M), x.dtype),
        grid=(N, n_cb),
        in_specs=[
            # Flat image per batch element; block index constant along the Cout axis,
            # so it is fetched once per n and stays resident in VMEM.
            pl.BlockSpec((1, Cin, M), lambda n, c: (n, 0, 0)),
            pl.BlockSpec((cout_blk, K * K * Cin), lambda n, c: (c, 0)),
            pl.BlockSpec((cout_blk, 1), lambda n, c: (c, 0)),
            pl.BlockSpec((1, M), lambda n, c: (0, 0)),
        ],
        out_specs=pl.BlockSpec((1, cout_blk, M), lambda n, c: (n, c, 0)),
        compiler_params=pltpu.CompilerParams(
            dimension_semantics=("parallel", "parallel"),
            vmem_limit_bytes=vmem_limit),
    )(x_flat, w2, b2, col_ids)

    return out.reshape(N, Cout, H, W)   # free reshape, already channel-major (NCHW)


# ----------------------------- Full module forward ----------------------------------------- #
@jax.jit
def initial_conv_forward(x, weight, bias):
    return conv2d_3x3_p1(x, weight, bias)


# ----------------------------- Pure-JAX reference (sanity check) --------------------------- #
def _reference_forward(x, weight, bias):
    out = lax.conv_general_dilated(
        x, weight, window_strides=(1, 1), padding=((1, 1), (1, 1)),
        dimension_numbers=("NCHW", "OIHW", "NCHW"))
    return out + bias[None, :, None, None]


if __name__ == "__main__":
    N, Cin, Cout, H, W = 2, 4, 8, 16, 16
    key = jax.random.PRNGKey(0)
    kx, kwt, kb = jax.random.split(key, 3)

    x = jax.random.normal(kx, (N, Cin, H, W), dtype=jnp.float32)
    weight = 0.1 * jax.random.normal(kwt, (Cout, Cin, 3, 3), dtype=jnp.float32)
    bias = 0.1 * jax.random.normal(kb, (Cout,), dtype=jnp.float32)

    out = initial_conv_forward(x, weight, bias)
    out = jax.block_until_ready(out)

    assert out.shape == (N, Cout, H, W), out.shape

    ref = _reference_forward(x, weight, bias)
    max_err = float(jnp.max(jnp.abs(out - ref)))
    assert max_err < 1e-3, f"max abs error too large: {max_err}"

    print("KERNEL_OK")
</pallas_src>

<mosaic_0001>
module attributes {stable_mosaic.version = 11 : i64} {
  func.func @_conv3x3_kernel(%arg0: i32, %arg1: i32, %arg2: memref<1x4x256xf32, #tpu.memory_space<vmem>>, %arg3: memref<8x36xf32, #tpu.memory_space<vmem>>, %arg4: memref<8x1xf32, #tpu.memory_space<vmem>>, %arg5: memref<1x256xi32, #tpu.memory_space<vmem>>, %arg6: memref<1x8x256xf32, #tpu.memory_space<vmem>>) attributes {dimension_semantics = [#tpu.dimension_semantics<parallel>, #tpu.dimension_semantics<parallel>], iteration_bounds = array<i64: 2, 1>, scalar_prefetch = 0 : i64, scratch_operands = 0 : i64, tpu.core_type = #tpu.core_type<tc>, window_params = [{transform_indices = @transform_0, window_bounds = array<i64: 1, 4, 256>}, {transform_indices = @transform_1, window_bounds = array<i64: 8, 36>}, {transform_indices = @transform_2, window_bounds = array<i64: 8, 1>}, {pipeline_mode = #tpu.pipeline_mode<synchronous>, transform_indices = @transform_3, window_bounds = array<i64: 1, 256>}, {transform_indices = @transform_4, window_bounds = array<i64: 1, 8, 256>}]} {
    %c0 = arith.constant 0 : index
    %c0_0 = arith.constant 0 : index
    %c0_1 = arith.constant 0 : index
    %0 = vector.load %arg2[%c0, %c0_0, %c0_1] : memref<1x4x256xf32, #tpu.memory_space<vmem>>, vector<1x4x256xf32>
    %1 = vector.shape_cast %0 : vector<1x4x256xf32> to vector<4x256xf32>
    %c0_2 = arith.constant 0 : index
    %c0_3 = arith.constant 0 : index
    %2 = vector.load %arg5[%c0_2, %c0_3] : memref<1x256xi32, #tpu.memory_space<vmem>>, vector<1x256xi32>
    %c0_i32 = arith.constant 0 : i32
    %3 = vector.broadcast %c0_i32 : i32 to vector<1x256xi32>
    %4 = arith.cmpi ne, %2, %3 : vector<1x256xi32>
    %c15_i32 = arith.constant 15 : i32
    %5 = vector.broadcast %c15_i32 : i32 to vector<1x256xi32>
    %6 = arith.cmpi ne, %2, %5 : vector<1x256xi32>
    %cst = arith.constant 0.000000e+00 : f32
    %7 = vector.broadcast %cst : f32 to vector<4x17xf32>
    %8 = vector.extract_strided_slice %1 {offsets = [0, 0], sizes = [4, 239], strides = [1, 1]} : vector<4x256xf32> to vector<4x239xf32>
    %9 = tpu.concatenate %7, %8 in 1 : vector<4x17xf32>, vector<4x239xf32> -> vector<4x256xf32>
    %cst_4 = arith.constant 0.000000e+00 : f32
    %10 = vector.broadcast %cst_4 : f32 to vector<4x256xf32>
    %11 = vector.shape_cast %4 : vector<1x256xi1> to vector<1x256xi1>
    %12 = vector.broadcast %11 : vector<1x256xi1> to vector<4x256xi1>
    %13 = arith.select %12, %9, %10 : vector<4x256xi1>, vector<4x256xf32>
    %cst_5 = arith.constant 0.000000e+00 : f32
    %14 = vector.broadcast %cst_5 : f32 to vector<4x16xf32>
    %15 = vector.extract_strided_slice %1 {offsets = [0, 0], sizes = [4, 240], strides = [1, 1]} : vector<4x256xf32> to vector<4x240xf32>
    %16 = tpu.concatenate %14, %15 in 1 : vector<4x16xf32>, vector<4x240xf32> -> vector<4x256xf32>
    %cst_6 = arith.constant 0.000000e+00 : f32
    %17 = vector.broadcast %cst_6 : f32 to vector<4x15xf32>
    %18 = vector.extract_strided_slice %1 {offsets = [0, 0], sizes = [4, 241], strides = [1, 1]} : vector<4x256xf32> to vector<4x241xf32>
    %19 = tpu.concatenate %17, %18 in 1 : vector<4x15xf32>, vector<4x241xf32> -> vector<4x256xf32>
    %cst_7 = arith.constant 0.000000e+00 : f32
    %20 = vector.broadcast %cst_7 : f32 to vector<4x256xf32>
    %21 = vector.shape_cast %6 : vector<1x256xi1> to vector<1x256xi1>
    %22 = vector.broadcast %21 : vector<1x256xi1> to vector<4x256xi1>
    %23 = arith.select %22, %19, %20 : vector<4x256xi1>, vector<4x256xf32>
    %cst_8 = arith.constant 0.000000e+00 : f32
    %24 = vector.broadcast %cst_8 : f32 to vector<4x1xf32>
    %25 = vector.extract_strided_slice %1 {offsets = [0, 0], sizes = [4, 255], strides = [1, 1]} : vector<4x256xf32> to vector<4x255xf32>
    %26 = tpu.concatenate %24, %25 in 1 : vector<4x1xf32>, vector<4x255xf32> -> vector<4x256xf32>
    %cst_9 = arith.constant 0.000000e+00 : f32
    %27 = vector.broadcast %cst_9 : f32 to vector<4x256xf32>
    %28 = vector.shape_cast %4 : vector<1x256xi1> to vector<1x256xi1>
    %29 = vector.broadcast %28 : vector<1x256xi1> to vector<4x256xi1>
    %30 = arith.select %29, %26, %27 : vector<4x256xi1>, vector<4x256xf32>
    %cst_10 = arith.constant 0.000000e+00 : f32
    %31 = vector.broadcast %cst_10 : f32 to vector<4x1xf32>
    %32 = vector.extract_strided_slice %1 {offsets = [0, 1], sizes = [4, 255], strides = [1, 1]} : vector<4x256xf32> to vector<4x255xf32>
    %33 = tpu.concatenate %32, %31 in 1 : vector<4x255xf32>, vector<4x1xf32> -> vector<4x256xf32>
    %cst_11 = arith.constant 0.000000e+00 : f32
    %34 = vector.broadcast %cst_11 : f32 to vector<4x256xf32>
    %35 = vector.shape_cast %6 : vector<1x256xi1> to vector<1x256xi1>
    %36 = vector.broadcast %35 : vector<1x256xi1> to vector<4x256xi1>
    %37 = arith.select %36, %33, %34 : vector<4x256xi1>, vector<4x256xf32>
    %cst_12 = arith.constant 0.000000e+00 : f32
    %38 = vector.broadcast %cst_12 : f32 to vector<4x15xf32>
    %39 = vector.extract_strided_slice %1 {offsets = [0, 15], sizes = [4, 241], strides = [1, 1]} : vector<4x256xf32> to vector<4x241xf32>
    %40 = tpu.concatenate %39, %38 in 1 : vector<4x241xf32>, vector<4x15xf32> -> vector<4x256xf32>
    %cst_13 = arith.constant 0.000000e+00 : f32
    %41 = vector.broadcast %cst_13 : f32 to vector<4x256xf32>
    %42 = vector.shape_cast %4 : vector<1x256xi1> to vector<1x256xi1>
    %43 = vector.broadcast %42 : vector<1x256xi1> to vector<4x256xi1>
    %44 = arith.select %43, %40, %41 : vector<4x256xi1>, vector<4x256xf32>
    %cst_14 = arith.constant 0.000000e+00 : f32
    %45 = vector.broadcast %cst_14 : f32 to vector<4x16xf32>
    %46 = vector.extract_strided_slice %1 {offsets = [0, 16], sizes = [4, 240], strides = [1, 1]} : vector<4x256xf32> to vector<4x240xf32>
    %47 = tpu.concatenate %46, %45 in 1 : vector<4x240xf32>, vector<4x16xf32> -> vector<4x256xf32>
    %cst_15 = arith.constant 0.000000e+00 : f32
    %48 = vector.broadcast %cst_15 : f32 to vector<4x17xf32>
    %49 = vector.extract_strided_slice %1 {offsets = [0, 17], sizes = [4, 239], strides = [1, 1]} : vector<4x256xf32> to vector<4x239xf32>
    %50 = tpu.concatenate %49, %48 in 1 : vector<4x239xf32>, vector<4x17xf32> -> vector<4x256xf32>
    %cst_16 = arith.constant 0.000000e+00 : f32
    %51 = vector.broadcast %cst_16 : f32 to vector<4x256xf32>
    %52 = vector.shape_cast %6 : vector<1x256xi1> to vector<1x256xi1>
    %53 = vector.broadcast %52 : vector<1x256xi1> to vector<4x256xi1>
    %54 = arith.select %53, %50, %51 : vector<4x256xi1>, vector<4x256xf32>
    %55 = tpu.concatenate %13, %16, %23, %30, %1, %37, %44, %47, %54 in 0 : vector<4x256xf32>, vector<4x256xf32>, vector<4x256xf32>, vector<4x256xf32>, vector<4x256xf32>, vector<4x256xf32>, vector<4x256xf32>, vector<4x256xf32>, vector<4x256xf32> -> vector<36x256xf32>
    %c0_17 = arith.constant 0 : index
    %c0_18 = arith.constant 0 : index
    %56 = vector.load %arg3[%c0_17, %c0_18] : memref<8x36xf32, #tpu.memory_space<vmem>>, vector<8x36xf32>
    %cst_19 = arith.constant dense<0.000000e+00> : vector<8x256xf32>
    %57 = tpu.matmul %56, %55, %cst_19 {dimension_numbers = #tpu.dot_dimension_numbers<[1], [0], [0], [1], [0, 0, 1, 1], [], []>} : vector<8x36xf32>, vector<36x256xf32>, vector<8x256xf32> -> vector<8x256xf32>
    %c0_20 = arith.constant 0 : index
    %c0_21 = arith.constant 0 : index
    %58 = vector.load %arg4[%c0_20, %c0_21] : memref<8x1xf32, #tpu.memory_space<vmem>>, vector<8x1xf32>
    %59 = vector.broadcast %58 : vector<8x1xf32> to vector<8x256xf32>
    %60 = arith.addf %57, %59 : vector<8x256xf32>
    %61 = vector.shape_cast %60 : vector<8x256xf32> to vector<1x8x256xf32>
    %c0_22 = arith.constant 0 : index
    %c0_23 = arith.constant 0 : index
    %c0_24 = arith.constant 0 : index
    %62 = vector.load %arg6[%c0_22, %c0_23, %c0_24] : memref<1x8x256xf32, #tpu.memory_space<vmem>>, vector<1x8x256xf32>
    tpu.vector_store %arg6[%c0_22, %c0_23, %c0_24], %61 {strides = array<i32>} : memref<1x8x256xf32, #tpu.memory_space<vmem>>, vector<1x8x256xf32>,
    return
  }
  func.func @transform_0(%arg0: i32, %arg1: i32) -> (i32, i32, i32) {
    %c0_i32 = arith.constant 0 : i32
    %c0_i32_0 = arith.constant 0 : i32
    %c0_i32_1 = arith.constant 0 : i32
    return %arg0, %c0_i32, %c0_i32_0 : i32, i32, i32
  }
  func.func @transform_1(%arg0: i32, %arg1: i32) -> (i32, i32) {
    %c0_i32 = arith.constant 0 : i32
    %c0_i32_0 = arith.constant 0 : i32
    return %arg1, %c0_i32 : i32, i32
  }
  func.func @transform_2(%arg0: i32, %arg1: i32) -> (i32, i32) {
    %c0_i32 = arith.constant 0 : i32
    %c0_i32_0 = arith.constant 0 : i32
    return %arg1, %c0_i32 : i32, i32
  }
  func.func @transform_3(%arg0: i32, %arg1: i32) -> (i32, i32) {
    %c0_i32 = arith.constant 0 : i32
    %c0_i32_0 = arith.constant 0 : i32
    %c0_i32_1 = arith.constant 0 : i32
    return %c0_i32, %c0_i32_0 : i32, i32
  }
  func.func @transform_4(%arg0: i32, %arg1: i32) -> (i32, i32, i32) {
    %c0_i32 = arith.constant 0 : i32
    %c0_i32_0 = arith.constant 0 : i32
    return %arg0, %arg1, %c0_i32 : i32, i32, i32
  }
}

</mosaic_0001>

<llo_original>
// kernel: tile.9
$region0: #{tile.9}
  %s0 = inlined_call_operand.vmem [shape: s32[16,16], index: 0, kind: input, shape index: {}]
  %s1 = inlined_call_operand.vmem [shape: s32[1,256], index: 1, kind: output, shape index: {}]
  $region1: #{tile.9} parent=0
    #allocation0 [shape = 'u8[8192]{0}', space=vmem, size = 0x2000, scoped, tag = 'scoped mem for output reshape']
    %s2 = smov 3
    %v3 = vld [vmem:[%s0] ss:$8 sm:%s2]
    %vm4 = vcmask 130048
    %5 = vst.msk [vmem:[#allocation0] ss:$8 sm:$0x3] %vm4, %v3
    %s6 = scalar_lea.vmem %s0, 7
    %s7 = smov 3
    %v8 = vld [vmem:[%s6] ss:$8 sm:%s7]
    %9 = vrot.lane.b32.xlu0 %v8, 112
    %v10 = vpop.permute.xlu0 %9
    %vm11 = vcmask 1048448
    %12 = vst.msk [vmem:[#allocation0] ss:$8 sm:$0x3] %vm11, %v10
    %s13 = scalar_lea.vmem %s0, 6
    %s14 = smov 3
    %v15 = vld [vmem:[%s13] ss:$8 sm:%s14]
    %16 = vrot.lane.b32.xlu0 %v15, 96
    %v17 = vpop.permute.xlu0 %16
    %vm18 = vcmask 917248
    %19 = vst.msk [vmem:[#allocation0] ss:$8 sm:$0x3] %vm18, %v17
    %s20 = scalar_lea.vmem %s0, 5
    %s21 = smov 3
    %v22 = vld [vmem:[%s20] ss:$8 sm:%s21]
    %23 = vrot.lane.b32.xlu0 %v22, 80
    %v24 = vpop.permute.xlu0 %23
    %vm25 = vcmask 786048
    %26 = vst.msk [vmem:[#allocation0] ss:$8 sm:$0x3] %vm25, %v24
    %s27 = scalar_lea.vmem %s0, 4
    %s28 = smov 3
    %v29 = vld [vmem:[%s27] ss:$8 sm:%s28]
    %30 = vrot.lane.b32.xlu0 %v29, 64
    %v31 = vpop.permute.xlu0 %30
    %vm32 = vcmask 654848
    %33 = vst.msk [vmem:[#allocation0] ss:$8 sm:$0x3] %vm32, %v31
    %s34 = scalar_lea.vmem %s0, 3
    %s35 = smov 3
    %v36 = vld [vmem:[%s34] ss:$8 sm:%s35]
    %37 = vrot.lane.b32.xlu0 %v36, 48
    %v38 = vpop.permute.xlu0 %37
    %vm39 = vcmask 523648
    %40 = vst.msk [vmem:[#allocation0] ss:$8 sm:$0x3] %vm39, %v38
    %s41 = scalar_lea.vmem %s0, 2
    %s42 = smov 3
    %v43 = vld [vmem:[%s41] ss:$8 sm:%s42]
    %44 = vrot.lane.b32.xlu0 %v43, 32
    %v45 = vpop.permute.xlu0 %44
    %vm46 = vcmask 392448
    %47 = vst.msk [vmem:[#allocation0] ss:$8 sm:$0x3] %vm46, %v45
    %s48 = scalar_lea.vmem %s0, 1
    %s49 = smov 3
    %v50 = vld [vmem:[%s48] ss:$8 sm:%s49]
    %51 = vrot.lane.b32.xlu0 %v50, 16
    %v52 = vpop.permute.xlu0 %51
    %vm53 = vcmask 261248
    %54 = vst.msk [vmem:[#allocation0] ss:$8 sm:$0x3] %vm53, %v52
    %s56 = sshllo.u32 0, 1
    %v58 = vld [vmem:[#allocation0] sm:%s56]
    %s59 = sshllo.u32 0, 1
    %60 = vst [vmem:[%s1] sm:%s59] %v58
    %s61 = scalar_lea.vmem [#allocation0], 8
    %v62 = vld [vmem:[%s61] sm:%s56]
    %s63 = sshllo.u32 0, 1
    %s64 = scalar_lea.vmem %s1, 1
    %65 = vst [vmem:[%s64] sm:%s63] %v62

// kernel: initial_conv_forward.1
$region0: #{initial_conv_forward.1}
  #allocation0 [shape = 'u32[]', space=smem, size = 0x4, offset = 0x4, fixed_abs, tag = 'smem constant byte address 0x4 - core index']
  #allocation1 [shape = 'u32[144,128]{1,0:T(1,128)}', space=vmem, size = 0x12000, scoped, tag = 'internal scratch']
  %s0 = inlined_call_operand.vmem [shape: f32[2,4,256], index: 0, kind: input, shape index: {}]
  %s1 = inlined_call_operand.vmem [shape: f32[8,36], index: 1, kind: input, shape index: {}]
  %s2 = inlined_call_operand.vmem [shape: f32[8,1], index: 2, kind: input, shape index: {}]
  %s3 = inlined_call_operand.vmem [shape: s32[1,256], index: 3, kind: input, shape index: {}]
  %s4 = inlined_call_operand.vmem [shape: f32[2,8,256], index: 4, kind: output, shape index: {}]
  %s5 = sld [smem:[#allocation0]]
  $region49: #{initial_conv_forward.1} parent=0
    _
  %s7 = ssub.s32 1, %s5
  %s8 = scalar_select 0, %s7, %s5
  loop: start=0, step=1, limit=4
  $region2: #{initial_conv_forward.1} parent=0 // loop_pre_header
    _
  $region3: #{initial_conv_forward.1} parent=0 // loop_header
    %s10 = sphi 0, %s14
    %p11 = scmp.ge.s32.totalorder %s10, 4
    %s17 = sphi 0, %s29
    %s18 = sphi 0, %s25
    %s19 = sphi 0, %s17
    %s20 = sphi 0, %s18
    %s21 = sphi 0, %s19
    %s22 = sphi 0, %s20
    %s32 = sphi 0, %s34
    %s35 = sphi 0, %s32
    %s36 = sphi 0, %s35
    %s52 = sphi 0, %s36
    %s58 = sphi 0, %s60
    %s61 = sphi 0, %s58
    %s62 = sphi 0, %s61
    %s78 = sphi 0, %s62
    %s84 = sphi 0, %s86
    %s87 = sphi 0, %s84
    %s88 = sphi 0, %s87
    %s104 = sphi 0, %s88
    %s108 = sphi 0, %s108
    %s110 = sphi 0, %s108
    %s111 = sphi 0, %s110
    %s125 = sphi 0, %s111
    %s133 = sphi 0, %s135
    %s136 = sphi 0, %s133
    %s137 = sphi 0, %s136
    %s153 = sphi 0, %s137
  $region4: #{initial_conv_forward.1} parent=0 // loop_header_branch
    %13 = sbr.rel (%p11) target = $region8
  $region5: #{initial_conv_forward.1} parent=0 // loop_body
    %s15 = ssub.s32 %s10, 1
    %s16 = ssub.s32 %s10, 2
    %s23 = sadd.s32 1, %s18
    %p24 = scmp.ge.s32.totalorder %s23, 1
    %s25 = scalar_select %p24, 0, %s23
    %s26 = sadd.s32 1, %s17
    %s27 = scalar_select %p24, %s26, %s17
    %p28 = scmp.ge.s32.totalorder %s27, 2
    %s29 = scalar_select %p28, 0, %s27
    %s30 = ssub.s32 %s17, %s29
    %p31 = scmp.eq.s32.totalorder %s30, 0
    %s33 = sadd.s32 %s32, 1
    %s34 = scalar_select %p31, %s32, %s33
    %p37 = pneg %p31
    %p38 = scmp.eq.s32.totalorder %s10, 1
    %p39 = por %p37, %p38
    %p40 = scmp.ne.s32.totalorder %s32, %s35
    %p41 = scmp.eq.s32.totalorder %s10, 0
    %p42 = por %p40, %p41
    %p43 = scmp.ne.s32.totalorder %s32, %s35
    %p44 = scmp.eq.s32.totalorder %s15, 1
    %p45 = por %p43, %p44
    %p46 = scmp.ne.s32.totalorder %s35, %s36
    %p47 = scmp.eq.s32.totalorder %s15, 0
    %p48 = por %p46, %p47
    %p49 = scmp.ne.s32.totalorder %s35, %s36
    %p50 = scmp.eq.s32.totalorder %s16, 1
    %p51 = por %p49, %p50
    %p53 = scmp.ne.s32.totalorder %s36, %s52
    %p54 = scmp.eq.s32.totalorder %s16, 0
    %p55 = por %p53, %p54
    %s56 = ssub.s32 %s18, %s25
    %p57 = scmp.eq.s32.totalorder %s56, 0
    %s59 = sadd.s32 %s58, 1
    %s60 = scalar_select %p57, %s58, %s59
    %p63 = pneg %p57
    %p64 = scmp.eq.s32.totalorder %s10, 1
    %p65 = por %p63, %p64
    %p66 = scmp.ne.s32.totalorder %s58, %s61
    %p67 = scmp.eq.s32.totalorder %s10, 0
    %p68 = por %p66, %p67
    %p69 = scmp.ne.s32.totalorder %s58, %s61
    %p70 = scmp.eq.s32.totalorder %s15, 1
    %p71 = por %p69, %p70
    %p72 = scmp.ne.s32.totalorder %s61, %s62
    %p73 = scmp.eq.s32.totalorder %s15, 0
    %p74 = por %p72, %p73
    %p75 = scmp.ne.s32.totalorder %s61, %s62
    %p76 = scmp.eq.s32.totalorder %s16, 1
    %p77 = por %p75, %p76
    %p79 = scmp.ne.s32.totalorder %s62, %s78
    %p80 = scmp.eq.s32.totalorder %s16, 0
    %p81 = por %p79, %p80
    %s82 = ssub.s32 %s18, %s25
    %p83 = scmp.eq.s32.totalorder %s82, 0
    %s85 = sadd.s32 %s84, 1
    %s86 = scalar_select %p83, %s84, %s85
    %p89 = pneg %p83
    %p90 = scmp.eq.s32.totalorder %s10, 1
    %p91 = por %p89, %p90
    %p92 = scmp.ne.s32.totalorder %s84, %s87
    %p93 = scmp.eq.s32.totalorder %s10, 0
    %p94 = por %p92, %p93
    %p95 = scmp.ne.s32.totalorder %s84, %s87
    %p96 = scmp.eq.s32.totalorder %s15, 1
    %p97 = por %p95, %p96
    %p98 = scmp.ne.s32.totalorder %s87, %s88
    %p99 = scmp.eq.s32.totalorder %s15, 0
    %p100 = por %p98, %p99
    %p101 = scmp.ne.s32.totalorder %s87, %s88
    %p102 = scmp.eq.s32.totalorder %s16, 1
    %p103 = por %p101, %p102
    %p105 = scmp.ne.s32.totalorder %s88, %s104
    %p106 = scmp.eq.s32.totalorder %s16, 0
    %p107 = por %p105, %p106
    %s109 = sadd.s32 %s108, 1
    %p112 = scmp.eq.s32.totalorder %s10, 1
    %p113 = scmp.ne.s32.totalorder %s108, %s110
    %p114 = scmp.eq.s32.totalorder %s10, 0
    %p115 = por %p113, %p114
    %p116 = scmp.ne.s32.totalorder %s108, %s110
    %p117 = scmp.eq.s32.totalorder %s15, 1
    %p118 = por %p116, %p117
    %p119 = scmp.ne.s32.totalorder %s110, %s111
    %p120 = scmp.eq.s32.totalorder %s15, 0
    %p121 = por %p119, %p120
    %p122 = scmp.ne.s32.totalorder %s110, %s111
    %p123 = scmp.eq.s32.totalorder %s16, 1
    %p124 = por %p122, %p123
    %p126 = scmp.ne.s32.totalorder %s111, %s125
    %p127 = scmp.eq.s32.totalorder %s16, 0
    %p128 = por %p126, %p127
    %s129 = ssub.s32 %s17, %s29
    %s130 = ssub.s32 %s18, %s25
    %s131 = sor.u32 %s129, %s130
    %p132 = scmp.eq.s32.totalorder %s131, 0
    %s134 = sadd.s32 %s133, 1
    %s135 = scalar_select %p132, %s133, %s134
    %p138 = pneg %p132
    %p139 = scmp.eq.s32.totalorder %s10, 1
    %p140 = por %p138, %p139
    %p141 = scmp.ne.s32.totalorder %s133, %s136
    %p142 = scmp.eq.s32.totalorder %s10, 0
    %p143 = por %p141, %p142
    %p144 = scmp.ne.s32.totalorder %s133, %s136
    %p145 = scmp.eq.s32.totalorder %s15, 1
    %p146 = por %p144, %p145
    %p147 = scmp.ne.s32.totalorder %s136, %s137
    %p148 = scmp.eq.s32.totalorder %s15, 0
    %p149 = por %p147, %p148
    %p150 = scmp.ne.s32.totalorder %s136, %s137
    %p151 = scmp.eq.s32.totalorder %s16, 1
    %p152 = por %p150, %p151
    %p154 = scmp.ne.s32.totalorder %s137, %s153
    %p155 = scmp.eq.s32.totalorder %s16, 0
    %p156 = por %p154, %p155
    %p157 = scmp.le.s32.totalorder 1, %s10
    %p158 = scmp.lt.s32.totalorder %s10, 3
    %p159 = pnand %p157, %p158
    %p160 = pneg %p159
    // Predicated region
    $region9: #{initial_conv_forward.1} parent=5 // pred_check
      _
    $region10: #{initial_conv_forward.1} parent=5 // pred_check_branch
      %162 = sbr.rel (%p159) target = $region12
    $region11: #{initial_conv_forward.1} parent=5 // pred_region
      %s163 = ssub.s32 %s10, 1
      // Predicated region
      $region13: #{initial_conv_forward.1} parent=11 // pred_check
        %p164 = pneg %p74
      $region14: #{initial_conv_forward.1} parent=11 // pred_check_branch
        %166 = sbr.rel (%p164) target = $region16
      $region15: #{initial_conv_forward.1} parent=11 // pred_region
        %p167 = scmp.lt.s32.totalorder %s20, 0
        %s168 = scalar_select %p167, %s20, 0
        %s169 = smul.addr %s168, 8
        %s170 = scalar_lea.vmem %s1, %s169
      $region16: #{initial_conv_forward.1} parent=11 // pred_fallthru
        _
      // Predicated region
      $region17: #{initial_conv_forward.1} parent=11 // pred_check
        %p171 = pneg %p100
      $region18: #{initial_conv_forward.1} parent=11 // pred_check_branch
        %173 = sbr.rel (%p171) target = $region20
      $region19: #{initial_conv_forward.1} parent=11 // pred_region
        %p174 = scmp.lt.s32.totalorder %s20, 0
        %s175 = scalar_select %p174, %s20, 0
        %s176 = smul.addr %s175, 8
        %s177 = scalar_lea.vmem %s2, %s176
      $region20: #{initial_conv_forward.1} parent=11 // pred_fallthru
        _
      // Predicated region
      $region21: #{initial_conv_forward.1} parent=11 // pred_check
        %p178 = pneg %p121
      $region22: #{initial_conv_forward.1} parent=11 // pred_check_branch
        %180 = sbr.rel (%p178) target = $region24
      $region23: #{initial_conv_forward.1} parent=11 // pred_region
        _
      $region24: #{initial_conv_forward.1} parent=11 // pred_fallthru
        _
    $region12: #{initial_conv_forward.1} parent=5 // pred_fallthru
      _
    %p181 = scmp.lt.s32.totalorder %s10, 2
    // Predicated region
    $region25: #{initial_conv_forward.1} parent=5 // pred_check
      %p182 = pneg %p181
    $region26: #{initial_conv_forward.1} parent=5 // pred_check_branch
      %184 = sbr.rel (%p182) target = $region28
    $region27: #{initial_conv_forward.1} parent=5 // pred_region
      // Predicated region
      $region29: #{initial_conv_forward.1} parent=27 // pred_check
        %p185 = pneg %p42
      $region30: #{initial_conv_forward.1} parent=27 // pred_check_branch
        %187 = sbr.rel (%p185) target = $region32
      $region31: #{initial_conv_forward.1} parent=27 // pred_region
        %p188 = scmp.lt.s32.totalorder %s17, 1
        %s189 = scalar_select %p188, %s17, 1
        %s190 = smul.addr %s189, 2
        %s191 = smul.addr %s190, 4
        %s192 = scalar_lea.vmem %s0, %s191
      $region32: #{initial_conv_forward.1} parent=27 // pred_fallthru
        _
    $region28: #{initial_conv_forward.1} parent=5 // pred_fallthru
      _
    %p193 = scmp.le.s32.totalorder 1, %s10
    %p194 = scmp.lt.s32.totalorder %s10, 3
    %p195 = pnand %p193, %p194
    %p196 = pneg %p195
    // Predicated region
    $region33: #{initial_conv_forward.1} parent=5 // pred_check
      _
    $region34: #{initial_conv_forward.1} parent=5 // pred_check_branch
      %198 = sbr.rel (%p195) target = $region36
    $region35: #{initial_conv_forward.1} parent=5 // pred_region
      %s199 = ssub.s32 %s10, 1
      %p200 = scmp.lt.s32.totalorder %s19, 1
      %s201 = scalar_select %p200, %s19, 1
      %s202 = smul.addr %s201, 2
      %s203 = smul.addr %s202, 4
      %s204 = scalar_lea.vmem %s0, %s203
      %p205 = pneg %p48
      %p206 = pneg %p45
      %p207 = scmp.lt.s32.totalorder %s20, 0
      %s208 = scalar_select %p207, %s20, 0
      %s209 = smul.addr %s208, 8
      %s210 = scalar_lea.vmem %s1, %s209
      %p211 = pneg %p74
      %p212 = pneg %p71
      %p213 = scmp.lt.s32.totalorder %s20, 0
      %s214 = scalar_select %p213, %s20, 0
      %s215 = smul.addr %s214, 8
      %s216 = scalar_lea.vmem %s2, %s215
      %p217 = pneg %p100
      %p218 = pneg %p97
      %p219 = pneg %p121
      %p220 = pneg %p118
      %p221 = pneg %p149
      %p222 = pneg %p146
      %p223 = scmp.lt.s32.totalorder %s19, 1
      %s224 = scalar_select %p223, %s19, 1
      %p225 = scmp.lt.s32.totalorder %s20, 0
      %s226 = scalar_select %p225, %s20, 0
      %s227 = smul.addr %s226, 2
      %s228 = smul.addr %s224, 2
      %s229 = sadd.s32 %s227, %s228
      %s230 = smul.addr %s229, 8
      %s231 = scalar_lea.vmem %s4, %s230
      %p232 = scmp.lt.s32.totalorder %s19, 1
      %s233 = scalar_select %p232, %s19, 1
      %s234 = smul.addr %s233, 2
      %s235 = smul.addr %s234, 4
      %s236 = scalar_lea.vmem %s0, %s235
      %p237 = scmp.lt.s32.totalorder %s20, 0
      %s238 = scalar_select %p237, %s20, 0
      %s239 = smul.addr %s238, 8
      %s240 = scalar_lea.vmem %s1, %s239
      %p241 = scmp.lt.s32.totalorder %s20, 0
      %s242 = scalar_select %p241, %s20, 0
      %s243 = smul.addr %s242, 8
      %s244 = scalar_lea.vmem %s2, %s243
      %p245 = scmp.lt.s32.totalorder %s19, 1
      %s246 = scalar_select %p245, %s19, 1
      %p247 = scmp.lt.s32.totalorder %s20, 0
      %s248 = scalar_select %p247, %s20, 0
      %s249 = smul.addr %s248, 2
      %s250 = smul.addr %s246, 2
      %s251 = sadd.s32 %s249, %s250
      %s252 = smul.addr %s251, 8
      %s253 = scalar_lea.vmem %s4, %s252
      %v254 = vld [vmem:[%s236] sm:$0xff]
      %v255 = vld [vmem:[%s3] sm:$0x3]
      %vm256 = vcmp.ne.s32.totalorder %v255, 0
      %vm257 = vcmp.ne.s32.totalorder %v255, 15
      %v259 = vcombine.high %v254, %v254
      %260 = vrot.lane.b32.xlu0 %v254, 17
      %v261 = vpop.permute.xlu0 %260
      %262 = vrot.lane.b32.xlu0 %v259, 17
      %v263 = vpop.permute.xlu0 %262
      %vm264 = vcmask 138240
      %v265 = vsel %vm264, %v261, %v263
      %v268 = vsel %vm264, 0.0, %v261
      %v269 = vsel %vm256, 1, 0
      %v270 = vlaneseq
      %v271 = vshrl.u32 %v270, 7
      %v272 = vsub.s32 0, %v271
      %v273 = vrot.slane %v269, %v272
      %v274 = vlaneseq
      %v275 = vshrl.u32 %v274, 7
      %v276 = vsub.s32 1, %v275
      %v277 = vrot.slane %v269, %v276
      %vm278 = vcmp.eq.s32.totalorder %v273, 1
      %vm279 = vcmp.eq.s32.totalorder %v277, 1
      %v280 = vsel %vm278, %v268, 0.0
      %v281 = vsel %vm279, %v265, 0.0
      %282 = vrot.lane.b32.xlu0 %v254, 16
      %v283 = vpop.permute.xlu0 %282
      %284 = vrot.lane.b32.xlu0 %v259, 16
      %v285 = vpop.permute.xlu0 %284
      %vm286 = vcmask 130048
      %v287 = vsel %vm286, %v283, %v285
      %v289 = vsel %vm286, 0.0, %v283
      %290 = vrot.lane.b32.xlu0 %v254, 15
      %v291 = vpop.permute.xlu0 %290
      %292 = vrot.lane.b32.xlu0 %v259, 15
      %v293 = vpop.permute.xlu0 %292
      %vm294 = vcmask 121856
      %v295 = vsel %vm294, %v291, %v293
      %v298 = vsel %vm294, 0.0, %v291
      %v299 = vsel %vm257, 1, 0
      %v300 = vlaneseq
      %v301 = vshrl.u32 %v300, 7
      %v302 = vsub.s32 0, %v301
      %v303 = vrot.slane %v299, %v302
      %v304 = vlaneseq
      %v305 = vshrl.u32 %v304, 7
      %v306 = vsub.s32 1, %v305
      %v307 = vrot.slane %v299, %v306
      %vm308 = vcmp.eq.s32.totalorder %v303, 1
      %vm309 = vcmp.eq.s32.totalorder %v307, 1
      %v310 = vsel %vm308, %v298, 0.0
      %v311 = vsel %vm309, %v295, 0.0
      %312 = vrot.lane.b32.xlu0 %v254, 1
      %v313 = vpop.permute.xlu0 %312
      %314 = vrot.lane.b32.xlu0 %v259, 1
      %v315 = vpop.permute.xlu0 %314
      %vm316 = vcmask 7168
      %v317 = vsel %vm316, %v313, %v315
      %v320 = vsel %vm316, 0.0, %v313
      %v321 = vsel %vm278, %v320, 0.0
      %v322 = vsel %vm279, %v317, 0.0
      %323 = vrot.lane.b32.xlu0 %v254, 127
      %v324 = vpop.permute.xlu0 %323
      %325 = vrot.lane.b32.xlu0 %v259, 127
      %v326 = vpop.permute.xlu0 %325
      %vm327 = vcmask 1039360
      %v328 = vsel %vm327, %v324, %v326
      %v331 = vsel %vm327, %v326, 0.0
      %v332 = vsel %vm308, %v328, 0.0
      %v333 = vsel %vm309, %v331, 0.0
      %334 = vrot.lane.b32.xlu0 %v254, 113
      %v335 = vpop.permute.xlu0 %334
      %336 = vrot.lane.b32.xlu0 %v259, 113
      %v337 = vpop.permute.xlu0 %336
      %vm338 = vcmask 924672
      %v339 = vsel %vm338, %v335, %v337
      %v342 = vsel %vm338, %v337, 0.0
      %v343 = vsel %vm278, %v339, 0.0
      %v344 = vsel %vm279, %v342, 0.0
      %345 = vrot.lane.b32.xlu0 %v254, 112
      %v346 = vpop.permute.xlu0 %345
      %347 = vrot.lane.b32.xlu0 %v259, 112
      %v348 = vpop.permute.xlu0 %347
      %vm349 = vcmask 916480
      %v350 = vsel %vm349, %v346, %v348
      %v352 = vsel %vm349, %v348, 0.0
      %353 = vrot.lane.b32.xlu0 %v254, 111
      %v354 = vpop.permute.xlu0 %353
      %355 = vrot.lane.b32.xlu0 %v259, 111
      %v356 = vpop.permute.xlu0 %355
      %vm357 = vcmask 908288
      %v358 = vsel %vm357, %v354, %v356
      %v361 = vsel %vm357, %v356, 0.0
      %v362 = vsel %vm308, %v358, 0.0
      %v363 = vsel %vm309, %v361, 0.0
      %v365 = vrot.slane %v289, 4
      %v366 = vrot.slane %v287, 4
      %v371 = vrot.slane %v321, 4
      %v372 = vrot.slane %v322, 4
      %v378 = vrot.slane %v332, 4
      %v379 = vrot.slane %v333, 4
      %v383 = vrot.slane %v350, 4
      %v384 = vrot.slane %v352, 4
      %vm387 = vcmask 1043456
      %v388 = vsel %vm387, %v280, %v365
      %v389 = vsel %vm387, %v281, %v366
      %v390 = vsel %vm387, %v310, %v371
      %v391 = vsel %vm387, %v311, %v372
      %v392 = vsel %vm387, %v254, %v378
      %v393 = vsel %vm387, %v259, %v379
      %v394 = vsel %vm387, %v343, %v383
      %v395 = vsel %vm387, %v344, %v384
      %v396 = vld [vmem:[%s240] sm:$0xff]
      %v397 = vld [vmem:[%s244] sm:$0xff]
      %399 = vset.pattern.permute.xlu0 0
      %400 = vperm.xlu0 %399, %v397
      %v401 = vpop.permute.xlu0 %400
      %vm403 = vcmask 293888
      %v405 = vsel %vm403, %v396, 0
      %v408 = vsel %vm387, %v362, 0
      %v411 = vsel %vm387, %v363, 0
      %413 = vmatprep.subr.mxu0 %v389
      %414 = vmatpush1.msra.mxu0 %v388
      %415 = vmatprep.subr.mxu0 %v391
      %416 = vmatpush1.msra.mxu0 %v390
      %417 = vmatprep.subr.mxu0 %v393
      %418 = vmatpush1.msra.mxu0 %v392
      %419 = vmatprep.subr.mxu0 %v395
      %420 = vmatpush1.msra.mxu0 %v394
      %421 = vmatprep.subr.mxu0 %v411
      %422 = vmatpush1.msra.mxu0 %v408
      %423 = vmatprep.subr.mxu0 0.0
      %424 = vmatpush1.msra.mxu0 0.0
      %425 = vmatprep.subr.mxu0 0.0
      %426 = vmatpush1.msra.mxu0 0.0
      %427 = vmatprep.subr.mxu0 0.0
      %428 = vmatpush1.msra.mxu0 0.0
      %429 = vmatprep.subr.mxu0 0.0
      %430 = vmatpush1.msra.mxu0 0.0
      %431 = vmatprep.subr.mxu0 0.0
      %432 = vmatpush1.msra.mxu0 0.0
      %433 = vmatprep.subr.mxu0 0.0
      %434 = vmatpush1.msra.mxu0 0.0
      %435 = vmatprep.subr.mxu0 0.0
      %436 = vmatpush1.msra.mxu0 0.0
      %437 = vmatprep.subr.mxu0 0.0
      %438 = vmatpush1.msra.mxu0 0.0
      %439 = vmatprep.subr.mxu0 0.0
      %440 = vmatpush1.msra.mxu0 0.0
      %441 = vmatprep.subr.mxu0 0.0
      %442 = vmatpush1.msra.mxu0 0.0
      %443 = vmatprep.subr.mxu0 0.0
      %444 = vmatpush1.msra.mxu0 0.0
      %445 = vmatprep.subr.mxu0 0.0
      %446 = vmatpush1.msra.mxu0 0.0
      %447 = vmatprep.subr.mxu0 0.0
      %448 = vmatpush1.msra.mxu0 0.0
      %449 = vmatprep.subr.mxu0 0.0
      %450 = vmatpush1.msra.mxu0 0.0
      %451 = vmatprep.subr.mxu0 0.0
      %452 = vmatpush1.msra.mxu0 0.0
      %453 = vmatprep.subr.mxu0 0.0
      %454 = vmatpush1.msra.mxu0 0.0
      %455 = vmatprep.subr.mxu0 0.0
      %456 = vmatpush1.msra.mxu0 0.0
      %457 = vmatprep.subr.mxu0 0.0
      %458 = vmatpush1.msra.mxu0 0.0
      %459 = vmatprep.subr.mxu0 0.0
      %460 = vmatpush1.msra.mxu0 0.0
      %461 = vmatprep.subr.mxu0 0.0
      %462 = vmatpush1.msra.mxu0 0.0
      %463 = vmatprep.subr.mxu0 0.0
      %464 = vmatpush1.msra.mxu0 0.0
      %465 = vmatprep.subr.mxu0 0.0
      %466 = vmatpush1.msra.mxu0 0.0
      %467 = vmatprep.subr.mxu0 0.0
      %468 = vmatpush1.msra.mxu0 0.0
      %469 = vmatprep.subr.mxu0 0.0
      %470 = vmatpush1.msra.mxu0 0.0
      %471 = vmatprep.subr.mxu0 0.0
      %472 = vmatpush1.msra.mxu0 0.0
      %473 = vmatprep.subr.mxu0 0.0
      %474 = vmatpush1.msra.mxu0 0.0
      %475 = vmatprep.subr.mxu0 0.0
      %476 = vmatpush1.msra.mxu0 0.0
      %477 = vmatprep.mubr.f32.mxu0 0.0
      %478 = vmatmul.mubr.f32.gmra.mrb[0].mxu0 %v405
      %v479 = vpop.f32.mrb[0].mxu0
      %v480 = vadd.f32 %v401, %v479
      %v481 = vpop.f32.mrb[0].mxu0
      %v482 = vadd.f32 %v401, %v481
      %483 = vdwg.mxu0
      %484 = vst [vmem:[%s253] sm:$0xff] %v480
      %485 = vst [vmem:[%s253 + $0x8] sm:$0xff] %v482
      %p486 = scmp.lt.s32.totalorder %s19, 1
      %s487 = scalar_select %p486, %s19, 1
      %p488 = scmp.lt.s32.totalorder %s20, 0
      %s489 = scalar_select %p488, %s20, 0
      %s490 = smul.addr %s489, 2
      %s491 = smul.addr %s487, 2
      %s492 = sadd.s32 %s490, %s491
      %s493 = smul.addr %s492, 8
      %s494 = scalar_lea.vmem %s4, %s493
      // Predicated region
      $region37: #{initial_conv_forward.1} parent=35 // pred_check
        %p495 = pneg %p146
      $region38: #{initial_conv_forward.1} parent=35 // pred_check_branch
        %497 = sbr.rel (%p495) target = $region40
      $region39: #{initial_conv_forward.1} parent=35 // pred_region
        _
      $region40: #{initial_conv_forward.1} parent=35 // pred_fallthru
        _
    $region36: #{initial_conv_forward.1} parent=5 // pred_fallthru
      _
    %p498 = scmp.le.s32.totalorder 2, %s10
    // Predicated region
    $region41: #{initial_conv_forward.1} parent=5 // pred_check
      %p499 = pneg %p498
    $region42: #{initial_conv_forward.1} parent=5 // pred_check_branch
      %501 = sbr.rel (%p499) target = $region44
    $region43: #{initial_conv_forward.1} parent=5 // pred_region
      %s502 = ssub.s32 %s10, 2
      // Predicated region
      $region45: #{initial_conv_forward.1} parent=43 // pred_check
        %p503 = pneg %p152
      $region46: #{initial_conv_forward.1} parent=43 // pred_check_branch
        %505 = sbr.rel (%p503) target = $region48
      $region47: #{initial_conv_forward.1} parent=43 // pred_region
        %p506 = scmp.lt.s32.totalorder %s21, 1
        %s507 = scalar_select %p506, %s21, 1
        %p508 = scmp.lt.s32.totalorder %s22, 0
        %s509 = scalar_select %p508, %s22, 0
        %s510 = smul.addr %s509, 2
        %s511 = smul.addr %s507, 2
        %s512 = sadd.s32 %s510, %s511
        %s513 = smul.addr %s512, 8
        %s514 = scalar_lea.vmem %s4, %s513
      $region48: #{initial_conv_forward.1} parent=43 // pred_fallthru
        _
    $region44: #{initial_conv_forward.1} parent=5 // pred_fallthru
      _
  $region6: #{initial_conv_forward.1} parent=0 // loop_footer
    %s14 = sadd.s32 1, %s10
  $region7: #{initial_conv_forward.1} parent=0 // loop_footer_branch
    %9 = sbr.rel target = $region3
  $region8: #{initial_conv_forward.1} parent=0 // loop_exit
    _

</llo_original>
